<compile_context>
chip_gen: v5e
topology: v5e:2x2
jax: 0.10.0
libtpu: 0.0.40
codegen_flags: <defaults>
</compile_context>

<pallas_src>
import functools

import jax
import jax.numpy as jnp
from jax.experimental import pallas as pl
from jax.experimental.pallas import tpu as pltpu


def actor_kernel(x_ref, w1_ref, w2_ref, b2_ref, w3_ref, b3_ref, o_ref):
    # fc1 (+ bias, via the ones row of the augmented input) on the MXU.
    # K=8 wastes MXU columns, but the MXU slot is otherwise idle here while the
    # VPU only does the ReLU + bf16 cast.
    h1 = jnp.dot(w1_ref[...], x_ref[...],
                 preferred_element_type=jnp.float32)            # (256, TB) f32
    h1 = jnp.maximum(h1, 0.0).astype(jnp.bfloat16)

    # fc2 on the MXU at native bf16 rate, f32 accumulation.
    h2 = jnp.dot(w2_ref[...], h1,
                 preferred_element_type=jnp.float32)            # (128, TB) f32
    h2 = jnp.maximum(h2 + b2_ref[...], 0.0).astype(jnp.bfloat16)

    # fc3 on the MXU (W3 zero-padded to 8 rows -> aligned shapes); take row 0.
    o3 = jnp.dot(w3_ref[...], h2,
                 preferred_element_type=jnp.float32)            # (8, TB) f32
    o_ref[...] = jnp.tanh(o3[0:1, :] + b3_ref[0, 0])            # (1, TB)


@functools.partial(jax.jit, static_argnames=("tb",))
def actor_forward(x, params, tb=8192):
    """x: (B, 3) fp32.  Returns (B, 1) fp32, matching the PyTorch forward."""
    w1, b1, w2, b2, w3, b3 = params  # PyTorch layouts (out, in) / (out,)
    B = x.shape[0]
    lanes = 128

    # --- batch tile selection -------------------------------------------------
    tb = max(lanes, (int(tb) // lanes) * lanes)          # multiple of 128
    b_lanes = pl.cdiv(B, lanes) * lanes
    if b_lanes <= lanes:
        tb = lanes
    else:
        # Keep at least 2 grid steps so both v7x TensorCores get work.
        tb = min(tb, pl.cdiv(b_lanes, 2 * lanes) * lanes)
    b_pad = pl.cdiv(B, tb) * tb
    n_tiles = b_pad // tb

    # --- input: transposed, ones-augmented, zero-padded (8, B_pad) -------------
    # rows 0..2 = x^T, row 3 = ones (folds the fc1 bias into the matmul),
    # rows 4..7 = zeros (K aligned to 8 sublanes).
    xt = x.T.astype(jnp.float32)                                     # (3, B)
    x_aug = jnp.concatenate(
        [xt, jnp.ones((1, B), jnp.float32), jnp.zeros((4, B), jnp.float32)],
        axis=0)                                                      # (8, B)
    x_aug = jnp.pad(x_aug, ((0, 0), (0, b_pad - B)))                 # (8, B_pad)

    # --- packed / casted parameters (tiny; folded by jit) ----------------------
    w1b1 = jnp.concatenate(
        [w1.astype(jnp.float32),
         b1.reshape(256, 1).astype(jnp.float32),
         jnp.zeros((256, 4), jnp.float32)], axis=1)                  # (256, 8)
    w2_bf = w2.astype(jnp.bfloat16)                                  # (128, 256)
    b2_c = b2.reshape(128, 1).astype(jnp.float32)                    # (128, 1)
    w3_p = jnp.concatenate(
        [w3.astype(jnp.bfloat16),
         jnp.zeros((7, 128), jnp.bfloat16)], axis=0)                 # (8, 128)
    b3_s = b3.reshape(1, 1).astype(jnp.float32)                      # (1, 1)

    cost = pl.CostEstimate(
        flops=2 * b_pad * (8 * 256 + 256 * 128 + 8 * 128),
        transcendentals=b_pad,
        bytes_accessed=b_pad * (8 + 1) * 4
        + (256 * 8 * 4 + 128 * 256 * 2 + 128 * 4 + 8 * 128 * 2 + 4),
    )

    out = pl.pallas_call(
        actor_kernel,
        out_shape=jax.ShapeDtypeStruct((1, b_pad), jnp.float32),
        grid=(n_tiles,),
        in_specs=[
            pl.BlockSpec((8, tb), lambda i: (0, i)),        # augmented x^T tile
            pl.BlockSpec((256, 8), lambda i: (0, 0)),       # [W1 | b1 | 0]
            pl.BlockSpec((128, 256), lambda i: (0, 0)),     # W2 (bf16)
            pl.BlockSpec((128, 1), lambda i: (0, 0)),       # b2
            pl.BlockSpec((8, 128), lambda i: (0, 0)),       # W3 padded (bf16)
            pl.BlockSpec(memory_space=pltpu.MemorySpace.SMEM),  # b3 scalar
        ],
        out_specs=pl.BlockSpec((1, tb), lambda i: (0, i)),
        compiler_params=pltpu.CompilerParams(
            dimension_semantics=("parallel",),
            vmem_limit_bytes=32 * 1024 * 1024,
        ),
        cost_estimate=cost,
    )(x_aug, w1b1, w2_bf, b2_c, w3_p, b3_s)

    return out[0, :B].reshape(B, 1)


def init_params(key):
    """PyTorch nn.Linear default init (uniform +-1/sqrt(fan_in)), kept in
    PyTorch (out, in) / (out,) layouts."""
    def linear(k, fan_in, fan_out):
        kw, kb = jax.random.split(k)
        bound = 1.0 / jnp.sqrt(fan_in)
        w = jax.random.uniform(kw, (fan_out, fan_in), jnp.float32, -bound, bound)
        b = jax.random.uniform(kb, (fan_out,), jnp.float32, -bound, bound)
        return w, b

    k1, k2, k3 = jax.random.split(key, 3)
    w1, b1 = linear(k1, 3, 256)      # (256, 3), (256,)
    w2, b2 = linear(k2, 256, 128)    # (128, 256), (128,)
    w3, b3 = linear(k3, 128, 1)      # (1, 128), (1,)
    return (w1, b1, w2, b2, w3, b3)


def reference_forward(x, params):
    """Plain-JAX f32 reference mirroring the PyTorch module."""
    w1, b1, w2, b2, w3, b3 = params
    hp = jax.lax.Precision.HIGHEST
    h = jnp.maximum(jnp.dot(x, w1.T, precision=hp) + b1, 0.0)
    h = jnp.maximum(jnp.dot(h, w2.T, precision=hp) + b2, 0.0)
    return jnp.tanh(jnp.dot(h, w3.T, precision=hp) + b3)


if __name__ == "__main__":
    key = jax.random.PRNGKey(0)
    kp, kx1, kx2 = jax.random.split(key, 3)

    params = init_params(kp)

    # Small batch of pendulum observations (cos theta, sin theta, theta_dot).
    x = jax.random.normal(kx1, (8, 3), jnp.float32)
    out = jax.block_until_ready(actor_forward(x, params))
    ref = reference_forward(x, params)
    assert out.shape == (8, 1)
    # bf16 MXU operands for fc2/fc3 -> relaxed tolerance vs. the f32 reference.
    assert jnp.allclose(out, ref, atol=2e-2, rtol=2e-2)

    # Multi-tile grid + batch-padding path (non-aligned batch, 2 tiles).
    x2 = jax.random.normal(kx2, (260, 3), jnp.float32)
    out2 = jax.block_until_ready(actor_forward(x2, params))
    ref2 = reference_forward(x2, params)
    assert out2.shape == (260, 1)
    assert jnp.allclose(out2, ref2, atol=2e-2, rtol=2e-2)

    # Explicit small tile override (3 grid steps).
    out3 = jax.block_until_ready(actor_forward(x2, params, tb=128))
    assert out3.shape == (260, 1)
    assert jnp.allclose(out3, ref2, atol=2e-2, rtol=2e-2)

    print("KERNEL_OK")
</pallas_src>

<mosaic_0001>
module attributes {stable_mosaic.version = 11 : i64} {
  func.func @actor_kernel(%arg0: i32, %arg1: memref<8x128xf32, #tpu.memory_space<vmem>>, %arg2: memref<256x8xf32, #tpu.memory_space<vmem>>, %arg3: memref<128x256xbf16, #tpu.memory_space<vmem>>, %arg4: memref<128x1xf32, #tpu.memory_space<vmem>>, %arg5: memref<8x128xbf16, #tpu.memory_space<vmem>>, %arg6: memref<1x1xf32, #tpu.memory_space<smem>>, %arg7: memref<1x128xf32, #tpu.memory_space<vmem>>) attributes {dimension_semantics = [#tpu.dimension_semantics<parallel>], iteration_bounds = array<i64: 1>, scalar_prefetch = 0 : i64, scratch_operands = 0 : i64, tpu.core_type = #tpu.core_type<tc>, window_params = [{transform_indices = @transform_0, window_bounds = array<i64: 8, 128>}, {pipeline_mode = #tpu.pipeline_mode<synchronous>, transform_indices = @transform_1, window_bounds = array<i64: 256, 8>}, {pipeline_mode = #tpu.pipeline_mode<synchronous>, transform_indices = @transform_2, window_bounds = array<i64: 128, 256>}, {pipeline_mode = #tpu.pipeline_mode<synchronous>, transform_indices = @transform_3, window_bounds = array<i64: 128, 1>}, {pipeline_mode = #tpu.pipeline_mode<synchronous>, transform_indices = @transform_4, window_bounds = array<i64: 8, 128>}, {transform_indices = @transform_5, window_bounds = array<i64: 1, 1>}, {transform_indices = @transform_6, window_bounds = array<i64: 1, 128>}]} {
    %c0 = arith.constant 0 : index
    %c0_0 = arith.constant 0 : index
    %0 = vector.load %arg2[%c0, %c0_0] : memref<256x8xf32, #tpu.memory_space<vmem>>, vector<256x8xf32>
    %c0_1 = arith.constant 0 : index
    %c0_2 = arith.constant 0 : index
    %1 = vector.load %arg1[%c0_1, %c0_2] : memref<8x128xf32, #tpu.memory_space<vmem>>, vector<8x128xf32>
    %cst = arith.constant dense<0.000000e+00> : vector<256x128xf32>
    %2 = tpu.matmul %0, %1, %cst {dimension_numbers = #tpu.dot_dimension_numbers<[1], [0], [0], [1], [0, 0, 1, 1], [], []>} : vector<256x8xf32>, vector<8x128xf32>, vector<256x128xf32> -> vector<256x128xf32>
    %cst_3 = arith.constant 0.000000e+00 : f32
    %3 = vector.broadcast %cst_3 : f32 to vector<256x128xf32>
    %4 = arith.maximumf %2, %3 : vector<256x128xf32>
    %5 = arith.truncf %4 : vector<256x128xf32> to vector<256x128xbf16>
    %c0_4 = arith.constant 0 : index
    %c0_5 = arith.constant 0 : index
    %6 = vector.load %arg3[%c0_4, %c0_5] : memref<128x256xbf16, #tpu.memory_space<vmem>>, vector<128x256xbf16>
    %cst_6 = arith.constant dense<0.000000e+00> : vector<128x128xf32>
    %7 = tpu.matmul %6, %5, %cst_6 {dimension_numbers = #tpu.dot_dimension_numbers<[1], [0], [0], [1], [0, 0, 1, 1], [], []>} : vector<128x256xbf16>, vector<256x128xbf16>, vector<128x128xf32> -> vector<128x128xf32>
    %c0_7 = arith.constant 0 : index
    %c0_8 = arith.constant 0 : index
    %8 = vector.load %arg4[%c0_7, %c0_8] : memref<128x1xf32, #tpu.memory_space<vmem>>, vector<128x1xf32>
    %9 = vector.broadcast %8 : vector<128x1xf32> to vector<128x128xf32>
    %10 = arith.addf %7, %9 : vector<128x128xf32>
    %cst_9 = arith.constant 0.000000e+00 : f32
    %11 = vector.broadcast %cst_9 : f32 to vector<128x128xf32>
    %12 = arith.maximumf %10, %11 : vector<128x128xf32>
    %13 = arith.truncf %12 : vector<128x128xf32> to vector<128x128xbf16>
    %c0_10 = arith.constant 0 : index
    %c0_11 = arith.constant 0 : index
    %14 = vector.load %arg5[%c0_10, %c0_11] : memref<8x128xbf16, #tpu.memory_space<vmem>>, vector<8x128xbf16>
    %cst_12 = arith.constant dense<0.000000e+00> : vector<8x128xf32>
    %15 = tpu.matmul %14, %13, %cst_12 {dimension_numbers = #tpu.dot_dimension_numbers<[1], [0], [0], [1], [0, 0, 1, 1], [], []>} : vector<8x128xbf16>, vector<128x128xbf16>, vector<8x128xf32> -> vector<8x128xf32>
    %16 = vector.extract_strided_slice %15 {offsets = [0, 0], sizes = [1, 128], strides = [1, 1]} : vector<8x128xf32> to vector<1x128xf32>
    %c0_13 = arith.constant 0 : index
    %c0_14 = arith.constant 0 : index
    %17 = memref.load %arg6[%c0_13, %c0_14] : memref<1x1xf32, #tpu.memory_space<smem>>
    %18 = vector.broadcast %17 : f32 to vector<1x128xf32>
    %19 = arith.addf %16, %18 : vector<1x128xf32>
    %20 = math.tanh %19 : vector<1x128xf32>
    %c0_15 = arith.constant 0 : index
    %c0_16 = arith.constant 0 : index
    %21 = vector.load %arg7[%c0_15, %c0_16] : memref<1x128xf32, #tpu.memory_space<vmem>>, vector<1x128xf32>
    tpu.vector_store %arg7[%c0_15, %c0_16], %20 {strides = array<i32>} : memref<1x128xf32, #tpu.memory_space<vmem>>, vector<1x128xf32>,
    return
  }
  func.func @transform_0(%arg0: i32) -> (i32, i32) {
    %c0_i32 = arith.constant 0 : i32
    %c0_i32_0 = arith.constant 0 : i32
    return %c0_i32, %arg0 : i32, i32
  }
  func.func @transform_1(%arg0: i32) -> (i32, i32) {
    %c0_i32 = arith.constant 0 : i32
    %c0_i32_0 = arith.constant 0 : i32
    %c0_i32_1 = arith.constant 0 : i32
    return %c0_i32, %c0_i32_0 : i32, i32
  }
  func.func @transform_2(%arg0: i32) -> (i32, i32) {
    %c0_i32 = arith.constant 0 : i32
    %c0_i32_0 = arith.constant 0 : i32
    %c0_i32_1 = arith.constant 0 : i32
    return %c0_i32, %c0_i32_0 : i32, i32
  }
  func.func @transform_3(%arg0: i32) -> (i32, i32) {
    %c0_i32 = arith.constant 0 : i32
    %c0_i32_0 = arith.constant 0 : i32
    %c0_i32_1 = arith.constant 0 : i32
    return %c0_i32, %c0_i32_0 : i32, i32
  }
  func.func @transform_4(%arg0: i32) -> (i32, i32) {
    %c0_i32 = arith.constant 0 : i32
    %c0_i32_0 = arith.constant 0 : i32
    %c0_i32_1 = arith.constant 0 : i32
    return %c0_i32, %c0_i32_0 : i32, i32
  }
  func.func @transform_5(%arg0: i32) -> (i32, i32) {
    %c0_i32 = arith.constant 0 : i32
    %c0_i32_0 = arith.constant 0 : i32
    %c0_i32_1 = arith.constant 0 : i32
    return %c0_i32, %c0_i32_0 : i32, i32
  }
  func.func @transform_6(%arg0: i32) -> (i32, i32) {
    %c0_i32 = arith.constant 0 : i32
    %c0_i32_0 = arith.constant 0 : i32
    return %c0_i32, %arg0 : i32, i32
  }
}

</mosaic_0001>

<llo_original>
// kernel: actor_forward.1
$region0: #{actor_forward.1}
  #allocation0 [shape = 'u32[]', space=smem, size = 0x4, offset = 0x4, fixed_abs, tag = 'smem constant byte address 0x4 - core index']
  #allocation1 [shape = 'u32[72,128]{1,0:T(1,128)}', space=vmem, size = 0x9000, scoped, tag = 'internal scratch']
  #allocation2 [shape = 'f32[1,1]{1,0:T(1,128)S(6)}', space=smem, size = 0x200, scoped, tag = 'scoped memory for actor_forward.1']
  %s0 = inlined_call_operand.vmem [shape: f32[8,128], index: 0, kind: input, shape index: {}]
  %s1 = inlined_call_operand.vmem [shape: f32[256,8], index: 1, kind: input, shape index: {}]
  %s2 = inlined_call_operand.vmem [shape: bf16[128,256], index: 2, kind: input, shape index: {}]
  %s3 = inlined_call_operand.vmem [shape: f32[128,1], index: 3, kind: input, shape index: {}]
  %s4 = inlined_call_operand.vmem [shape: bf16[8,128], index: 4, kind: input, shape index: {}]
  %s5 = inlined_call_operand.<no memory space> [shape: f32[1,1], index: 5, kind: input, shape index: {}]
  %s6 = inlined_call_operand.vmem [shape: f32[1,128], index: 6, kind: output, shape index: {}]
  %s7 = sld [smem:[#allocation0]]
  $region34: #{actor_forward.1} parent=0
    _
  %s9 = ssub.s32 1, %s7
  %s10 = scalar_select 0, %s9, %s7
  %11 = sst [smem:[#allocation2]] %s5
  // Predicated region
  $region2: #{actor_forward.1} parent=0 // pred_check
    _
  $region3: #{actor_forward.1} parent=0 // pred_check_branch
    %13 = sbr.rel (0) target = $region5
  $region4: #{actor_forward.1} parent=0 // pred_region
    _
  $region5: #{actor_forward.1} parent=0 // pred_fallthru
    _
  // Predicated region
  $region6: #{actor_forward.1} parent=0 // pred_check
    _
  $region7: #{actor_forward.1} parent=0 // pred_check_branch
    %15 = sbr.rel (0) target = $region9
  $region8: #{actor_forward.1} parent=0 // pred_region
    _
  $region9: #{actor_forward.1} parent=0 // pred_fallthru
    _
  // Predicated region
  $region10: #{actor_forward.1} parent=0 // pred_check
    _
  $region11: #{actor_forward.1} parent=0 // pred_check_branch
    %17 = sbr.rel (0) target = $region13
  $region12: #{actor_forward.1} parent=0 // pred_region
    _
  $region13: #{actor_forward.1} parent=0 // pred_fallthru
    _
  // Predicated region
  $region14: #{actor_forward.1} parent=0 // pred_check
    _
  $region15: #{actor_forward.1} parent=0 // pred_check_branch
    %19 = sbr.rel (0) target = $region17
  $region16: #{actor_forward.1} parent=0 // pred_region
    _
  $region17: #{actor_forward.1} parent=0 // pred_fallthru
    _
  // Predicated region
  $region18: #{actor_forward.1} parent=0 // pred_check
    _
  $region19: #{actor_forward.1} parent=0 // pred_check_branch
    %21 = sbr.rel (0) target = $region21
  $region20: #{actor_forward.1} parent=0 // pred_region
    _
  $region21: #{actor_forward.1} parent=0 // pred_fallthru
    _
  // Predicated region
  $region22: #{actor_forward.1} parent=0 // pred_check
    _
  $region23: #{actor_forward.1} parent=0 // pred_check_branch
    %23 = sbr.rel (0) target = $region25
  $region24: #{actor_forward.1} parent=0 // pred_region
    _
  $region25: #{actor_forward.1} parent=0 // pred_fallthru
    _
  %v24 = vld [vmem:[%s1] sm:$0xff]
  %v25 = vld [vmem:[%s1 + $0x8] sm:$0xff]
  %v26 = vld [vmem:[%s1 + $0x10] sm:$0xff]
  %v27 = vld [vmem:[%s1 + $0x18] sm:$0xff]
  %v28 = vld [vmem:[%s1 + $0x20] sm:$0xff]
  %v29 = vld [vmem:[%s1 + $0x28] sm:$0xff]
  %v30 = vld [vmem:[%s1 + $0x30] sm:$0xff]
  %v31 = vld [vmem:[%s1 + $0x38] sm:$0xff]
  %v32 = vld [vmem:[%s1 + $0x40] sm:$0xff]
  %v33 = vld [vmem:[%s1 + $0x48] sm:$0xff]
  %v34 = vld [vmem:[%s1 + $0x50] sm:$0xff]
  %v35 = vld [vmem:[%s1 + $0x58] sm:$0xff]
  %v36 = vld [vmem:[%s1 + $0x60] sm:$0xff]
  %v37 = vld [vmem:[%s1 + $0x68] sm:$0xff]
  %v38 = vld [vmem:[%s1 + $0x70] sm:$0xff]
  %v39 = vld [vmem:[%s1 + $0x78] sm:$0xff]
  %v40 = vld [vmem:[%s1 + $0x80] sm:$0xff]
  %v41 = vld [vmem:[%s1 + $0x88] sm:$0xff]
  %v42 = vld [vmem:[%s1 + $0x90] sm:$0xff]
  %v43 = vld [vmem:[%s1 + $0x98] sm:$0xff]
  %v44 = vld [vmem:[%s1 + $0xa0] sm:$0xff]
  %v45 = vld [vmem:[%s1 + $0xa8] sm:$0xff]
  %v46 = vld [vmem:[%s1 + $0xb0] sm:$0xff]
  %v47 = vld [vmem:[%s1 + $0xb8] sm:$0xff]
  %v48 = vld [vmem:[%s1 + $0xc0] sm:$0xff]
  %v49 = vld [vmem:[%s1 + $0xc8] sm:$0xff]
  %v50 = vld [vmem:[%s1 + $0xd0] sm:$0xff]
  %v51 = vld [vmem:[%s1 + $0xd8] sm:$0xff]
  %v52 = vld [vmem:[%s1 + $0xe0] sm:$0xff]
  %v53 = vld [vmem:[%s1 + $0xe8] sm:$0xff]
  %v54 = vld [vmem:[%s1 + $0xf0] sm:$0xff]
  %v55 = vld [vmem:[%s1 + $0xf8] sm:$0xff]
  %v56 = vld [vmem:[%s0] sm:$0xff]
  %vm57 = vcmask 64512
  %v59 = vsel %vm57, %v24, 0
  %v62 = vsel %vm57, %v25, 0
  %v65 = vsel %vm57, %v26, 0
  %v68 = vsel %vm57, %v27, 0
  %v71 = vsel %vm57, %v28, 0
  %v74 = vsel %vm57, %v29, 0
  %v77 = vsel %vm57, %v30, 0
  %v80 = vsel %vm57, %v31, 0
  %v83 = vsel %vm57, %v32, 0
  %v86 = vsel %vm57, %v33, 0
  %v89 = vsel %vm57, %v34, 0
  %v92 = vsel %vm57, %v35, 0
  %v95 = vsel %vm57, %v36, 0
  %v98 = vsel %vm57, %v37, 0
  %v101 = vsel %vm57, %v38, 0
  %v104 = vsel %vm57, %v39, 0
  %v107 = vsel %vm57, %v40, 0
  %v110 = vsel %vm57, %v41, 0
  %v113 = vsel %vm57, %v42, 0
  %v116 = vsel %vm57, %v43, 0
  %v119 = vsel %vm57, %v44, 0
  %v122 = vsel %vm57, %v45, 0
  %v125 = vsel %vm57, %v46, 0
  %v128 = vsel %vm57, %v47, 0
  %v131 = vsel %vm57, %v48, 0
  %v134 = vsel %vm57, %v49, 0
  %v137 = vsel %vm57, %v50, 0
  %v140 = vsel %vm57, %v51, 0
  %v143 = vsel %vm57, %v52, 0
  %v146 = vsel %vm57, %v53, 0
  %v149 = vsel %vm57, %v54, 0
  %v152 = vsel %vm57, %v55, 0
  %154 = vmatpush.msra.mxu0 0.0
  %155 = vmatpush.msra.mxu0 0.0
  %156 = vmatpush.msra.mxu0 0.0
  %157 = vmatpush.msra.mxu0 0.0
  %158 = vmatpush.msra.mxu0 0.0
  %159 = vmatpush.msra.mxu0 0.0
  %160 = vmatpush.msra.mxu0 0.0
  %161 = vmatpush.msra.mxu0 0.0
  %162 = vmatpush.msra.mxu0 0.0
  %163 = vmatpush.msra.mxu0 0.0
  %164 = vmatpush.msra.mxu0 0.0
  %165 = vmatpush.msra.mxu0 0.0
  %166 = vmatpush.msra.mxu0 0.0
  %167 = vmatpush.msra.mxu0 0.0
  %168 = vmatpush.msra.mxu0 0.0
  %169 = vmatpush.msra.mxu0 %v56
  %170 = vmatmul.f32.gmra.mxu0 %v59
  %v171 = vpop.f32.mrf.mxu0
  %v172 = vadd.f32 0.0, %v171
  %173 = vmatmul.f32.gmra.mxu0 %v62
  %v174 = vpop.f32.mrf.mxu0
  %v175 = vadd.f32 0.0, %v174
  %176 = vmatmul.f32.gmra.mxu0 %v65
  %v177 = vpop.f32.mrf.mxu0
  %v178 = vadd.f32 0.0, %v177
  %179 = vmatmul.f32.gmra.mxu0 %v68
  %v180 = vpop.f32.mrf.mxu0
  %v181 = vadd.f32 0.0, %v180
  %182 = vmatmul.f32.gmra.mxu0 %v71
  %v183 = vpop.f32.mrf.mxu0
  %v184 = vadd.f32 0.0, %v183
  %185 = vmatmul.f32.gmra.mxu0 %v74
  %v186 = vpop.f32.mrf.mxu0
  %v187 = vadd.f32 0.0, %v186
  %188 = vmatmul.f32.gmra.mxu0 %v77
  %v189 = vpop.f32.mrf.mxu0
  %v190 = vadd.f32 0.0, %v189
  %191 = vmatmul.f32.gmra.mxu0 %v80
  %v192 = vpop.f32.mrf.mxu0
  %v193 = vadd.f32 0.0, %v192
  %194 = vmatmul.f32.gmra.mxu0 %v83
  %v195 = vpop.f32.mrf.mxu0
  %v196 = vadd.f32 0.0, %v195
  %197 = vmatmul.f32.gmra.mxu0 %v86
  %v198 = vpop.f32.mrf.mxu0
  %v199 = vadd.f32 0.0, %v198
  %200 = vmatmul.f32.gmra.mxu0 %v89
  %v201 = vpop.f32.mrf.mxu0
  %v202 = vadd.f32 0.0, %v201
  %203 = vmatmul.f32.gmra.mxu0 %v92
  %v204 = vpop.f32.mrf.mxu0
  %v205 = vadd.f32 0.0, %v204
  %206 = vmatmul.f32.gmra.mxu0 %v95
  %v207 = vpop.f32.mrf.mxu0
  %v208 = vadd.f32 0.0, %v207
  %209 = vmatmul.f32.gmra.mxu0 %v98
  %v210 = vpop.f32.mrf.mxu0
  %v211 = vadd.f32 0.0, %v210
  %212 = vmatmul.f32.gmra.mxu0 %v101
  %v213 = vpop.f32.mrf.mxu0
  %v214 = vadd.f32 0.0, %v213
  %215 = vmatmul.f32.gmra.mxu0 %v104
  %v216 = vpop.f32.mrf.mxu0
  %v217 = vadd.f32 0.0, %v216
  %218 = vmatmul.f32.gmra.mxu0 %v107
  %v219 = vpop.f32.mrf.mxu0
  %v220 = vadd.f32 0.0, %v219
  %221 = vmatmul.f32.gmra.mxu0 %v110
  %v222 = vpop.f32.mrf.mxu0
  %v223 = vadd.f32 0.0, %v222
  %224 = vmatmul.f32.gmra.mxu0 %v113
  %v225 = vpop.f32.mrf.mxu0
  %v226 = vadd.f32 0.0, %v225
  %227 = vmatmul.f32.gmra.mxu0 %v116
  %v228 = vpop.f32.mrf.mxu0
  %v229 = vadd.f32 0.0, %v228
  %230 = vmatmul.f32.gmra.mxu0 %v119
  %v231 = vpop.f32.mrf.mxu0
  %v232 = vadd.f32 0.0, %v231
  %233 = vmatmul.f32.gmra.mxu0 %v122
  %v234 = vpop.f32.mrf.mxu0
  %v235 = vadd.f32 0.0, %v234
  %236 = vmatmul.f32.gmra.mxu0 %v125
  %v237 = vpop.f32.mrf.mxu0
  %v238 = vadd.f32 0.0, %v237
  %239 = vmatmul.f32.gmra.mxu0 %v128
  %v240 = vpop.f32.mrf.mxu0
  %v241 = vadd.f32 0.0, %v240
  %242 = vmatmul.f32.gmra.mxu0 %v131
  %v243 = vpop.f32.mrf.mxu0
  %v244 = vadd.f32 0.0, %v243
  %245 = vmatmul.f32.gmra.mxu0 %v134
  %v246 = vpop.f32.mrf.mxu0
  %v247 = vadd.f32 0.0, %v246
  %248 = vmatmul.f32.gmra.mxu0 %v137
  %v249 = vpop.f32.mrf.mxu0
  %v250 = vadd.f32 0.0, %v249
  %251 = vmatmul.f32.gmra.mxu0 %v140
  %v252 = vpop.f32.mrf.mxu0
  %v253 = vadd.f32 0.0, %v252
  %254 = vmatmul.f32.gmra.mxu0 %v143
  %v255 = vpop.f32.mrf.mxu0
  %v256 = vadd.f32 0.0, %v255
  %257 = vmatmul.f32.gmra.mxu0 %v146
  %v258 = vpop.f32.mrf.mxu0
  %v259 = vadd.f32 0.0, %v258
  %260 = vmatmul.f32.gmra.mxu0 %v149
  %v261 = vpop.f32.mrf.mxu0
  %v262 = vadd.f32 0.0, %v261
  %263 = vmatmul.f32.gmra.mxu0 %v152
  %v264 = vpop.f32.mrf.mxu0
  %v265 = vadd.f32 0.0, %v264
  %266 = vdwg.mxu0
  %v267 = vmax.f32 %v172, 0.0
  %v268 = vmax.f32 %v175, 0.0
  %v269 = vmax.f32 %v178, 0.0
  %v270 = vmax.f32 %v181, 0.0
  %v271 = vmax.f32 %v184, 0.0
  %v272 = vmax.f32 %v187, 0.0
  %v273 = vmax.f32 %v190, 0.0
  %v274 = vmax.f32 %v193, 0.0
  %v275 = vmax.f32 %v196, 0.0
  %v276 = vmax.f32 %v199, 0.0
  %v277 = vmax.f32 %v202, 0.0
  %v278 = vmax.f32 %v205, 0.0
  %v279 = vmax.f32 %v208, 0.0
  %v280 = vmax.f32 %v211, 0.0
  %v281 = vmax.f32 %v214, 0.0
  %v282 = vmax.f32 %v217, 0.0
  %v283 = vmax.f32 %v220, 0.0
  %v284 = vmax.f32 %v223, 0.0
  %v285 = vmax.f32 %v226, 0.0
  %v286 = vmax.f32 %v229, 0.0
  %v287 = vmax.f32 %v232, 0.0
  %v288 = vmax.f32 %v235, 0.0
  %v289 = vmax.f32 %v238, 0.0
  %v290 = vmax.f32 %v241, 0.0
  %v291 = vmax.f32 %v244, 0.0
  %v292 = vmax.f32 %v247, 0.0
  %v293 = vmax.f32 %v250, 0.0
  %v294 = vmax.f32 %v253, 0.0
  %v295 = vmax.f32 %v256, 0.0
  %v296 = vmax.f32 %v259, 0.0
  %v297 = vmax.f32 %v262, 0.0
  %v298 = vmax.f32 %v265, 0.0
  %v299 = vpack.c.bf16 %v268, %v267
  %v300 = vpack.c.bf16 %v270, %v269
  %v301 = vpack.c.bf16 %v272, %v271
  %v302 = vpack.c.bf16 %v274, %v273
  %v303 = vpack.c.bf16 %v276, %v275
  %v304 = vpack.c.bf16 %v278, %v277
  %v305 = vpack.c.bf16 %v280, %v279
  %v306 = vpack.c.bf16 %v282, %v281
  %v307 = vpack.c.bf16 %v284, %v283
  %v308 = vpack.c.bf16 %v286, %v285
  %v309 = vpack.c.bf16 %v288, %v287
  %v310 = vpack.c.bf16 %v290, %v289
  %v311 = vpack.c.bf16 %v292, %v291
  %v312 = vpack.c.bf16 %v294, %v293
  %v313 = vpack.c.bf16 %v296, %v295
  %v314 = vpack.c.bf16 %v298, %v297
  %v315 = vld [vmem:[%s2] sm:$0xff]
  %v316 = vld [vmem:[%s2 + $0x8] sm:$0xff]
  %v317 = vld [vmem:[%s2 + $0x10] sm:$0xff]
  %v318 = vld [vmem:[%s2 + $0x18] sm:$0xff]
  %v319 = vld [vmem:[%s2 + $0x20] sm:$0xff]
  %v320 = vld [vmem:[%s2 + $0x28] sm:$0xff]
  %v321 = vld [vmem:[%s2 + $0x30] sm:$0xff]
  %v322 = vld [vmem:[%s2 + $0x38] sm:$0xff]
  %v323 = vld [vmem:[%s2 + $0x40] sm:$0xff]
  %v324 = vld [vmem:[%s2 + $0x48] sm:$0xff]
  %v325 = vld [vmem:[%s2 + $0x50] sm:$0xff]
  %v326 = vld [vmem:[%s2 + $0x58] sm:$0xff]
  %v327 = vld [vmem:[%s2 + $0x60] sm:$0xff]
  %v328 = vld [vmem:[%s2 + $0x68] sm:$0xff]
  %v329 = vld [vmem:[%s2 + $0x70] sm:$0xff]
  %v330 = vld [vmem:[%s2 + $0x78] sm:$0xff]
  %v331 = vld [vmem:[%s3] sm:$0xff]
  %v332 = vld [vmem:[%s3 + $0x8] sm:$0xff]
  %v333 = vld [vmem:[%s3 + $0x10] sm:$0xff]
  %v334 = vld [vmem:[%s3 + $0x18] sm:$0xff]
  %v335 = vld [vmem:[%s3 + $0x20] sm:$0xff]
  %v336 = vld [vmem:[%s3 + $0x28] sm:$0xff]
  %v337 = vld [vmem:[%s3 + $0x30] sm:$0xff]
  %v338 = vld [vmem:[%s3 + $0x38] sm:$0xff]
  %v339 = vld [vmem:[%s3 + $0x40] sm:$0xff]
  %v340 = vld [vmem:[%s3 + $0x48] sm:$0xff]
  %v341 = vld [vmem:[%s3 + $0x50] sm:$0xff]
  %v342 = vld [vmem:[%s3 + $0x58] sm:$0xff]
  %v343 = vld [vmem:[%s3 + $0x60] sm:$0xff]
  %v344 = vld [vmem:[%s3 + $0x68] sm:$0xff]
  %v345 = vld [vmem:[%s3 + $0x70] sm:$0xff]
  %v346 = vld [vmem:[%s3 + $0x78] sm:$0xff]
  %348 = vset.pattern.permute.xlu0 0
  %349 = vperm.xlu0 %348, %v331
  %v350 = vpop.permute.xlu0 %349
  %353 = vset.pattern.permute.xlu0 0
  %354 = vperm.xlu0 %353, %v332
  %v355 = vpop.permute.xlu0 %354
  %358 = vset.pattern.permute.xlu0 0
  %359 = vperm.xlu0 %358, %v333
  %v360 = vpop.permute.xlu0 %359
  %363 = vset.pattern.permute.xlu0 0
  %364 = vperm.xlu0 %363, %v334
  %v365 = vpop.permute.xlu0 %364
  %368 = vset.pattern.permute.xlu0 0
  %369 = vperm.xlu0 %368, %v335
  %v370 = vpop.permute.xlu0 %369
  %373 = vset.pattern.permute.xlu0 0
  %374 = vperm.xlu0 %373, %v336
  %v375 = vpop.permute.xlu0 %374
  %378 = vset.pattern.permute.xlu0 0
  %379 = vperm.xlu0 %378, %v337
  %v380 = vpop.permute.xlu0 %379
  %383 = vset.pattern.permute.xlu0 0
  %384 = vperm.xlu0 %383, %v338
  %v385 = vpop.permute.xlu0 %384
  %388 = vset.pattern.permute.xlu0 0
  %389 = vperm.xlu0 %388, %v339
  %v390 = vpop.permute.xlu0 %389
  %393 = vset.pattern.permute.xlu0 0
  %394 = vperm.xlu0 %393, %v340
  %v395 = vpop.permute.xlu0 %394
  %398 = vset.pattern.permute.xlu0 0
  %399 = vperm.xlu0 %398, %v341
  %v400 = vpop.permute.xlu0 %399
  %403 = vset.pattern.permute.xlu0 0
  %404 = vperm.xlu0 %403, %v342
  %v405 = vpop.permute.xlu0 %404
  %408 = vset.pattern.permute.xlu0 0
  %409 = vperm.xlu0 %408, %v343
  %v410 = vpop.permute.xlu0 %409
  %413 = vset.pattern.permute.xlu0 0
  %414 = vperm.xlu0 %413, %v344
  %v415 = vpop.permute.xlu0 %414
  %418 = vset.pattern.permute.xlu0 0
  %419 = vperm.xlu0 %418, %v345
  %v420 = vpop.permute.xlu0 %419
  %423 = vset.pattern.permute.xlu0 0
  %424 = vperm.xlu0 %423, %v346
  %v425 = vpop.permute.xlu0 %424
  %v443 = vunpack.c.l.b16 %v315
  %v444 = vunpack.c.h.b16 %v315
  %v445 = vunpack.c.l.b16 %v316
  %v446 = vunpack.c.h.b16 %v316
  %v447 = vunpack.c.l.b16 %v317
  %v448 = vunpack.c.h.b16 %v317
  %v449 = vunpack.c.l.b16 %v318
  %v450 = vunpack.c.h.b16 %v318
  %v451 = vunpack.c.l.b16 %v319
  %v452 = vunpack.c.h.b16 %v319
  %v453 = vunpack.c.l.b16 %v320
  %v454 = vunpack.c.h.b16 %v320
  %v455 = vunpack.c.l.b16 %v321
  %v456 = vunpack.c.h.b16 %v321
  %v457 = vunpack.c.l.b16 %v322
  %v458 = vunpack.c.h.b16 %v322
  %v459 = vunpack.c.l.b16 %v323
  %v460 = vunpack.c.h.b16 %v323
  %v461 = vunpack.c.l.b16 %v324
  %v462 = vunpack.c.h.b16 %v324
  %v463 = vunpack.c.l.b16 %v325
  %v464 = vunpack.c.h.b16 %v325
  %v465 = vunpack.c.l.b16 %v326
  %v466 = vunpack.c.h.b16 %v326
  %v467 = vunpack.c.l.b16 %v327
  %v468 = vunpack.c.h.b16 %v327
  %v469 = vunpack.c.l.b16 %v328
  %v470 = vunpack.c.h.b16 %v328
  %v471 = vunpack.c.l.b16 %v329
  %v472 = vunpack.c.h.b16 %v329
  %v473 = vunpack.c.l.b16 %v330
  %v474 = vunpack.c.h.b16 %v330
  %v475 = vpack.c.b16 %v445, %v443
  %v476 = vpack.c.b16 %v446, %v444
  %v477 = vpack.c.b16 %v449, %v447
  %v478 = vpack.c.b16 %v450, %v448
  %v479 = vpack.c.b16 %v453, %v451
  %v480 = vpack.c.b16 %v454, %v452
  %v481 = vpack.c.b16 %v457, %v455
  %v482 = vpack.c.b16 %v458, %v456
  %v483 = vpack.c.b16 %v461, %v459
  %v484 = vpack.c.b16 %v462, %v460
  %v485 = vpack.c.b16 %v465, %v463
  %v486 = vpack.c.b16 %v466, %v464
  %v487 = vpack.c.b16 %v469, %v467
  %v488 = vpack.c.b16 %v470, %v468
  %v489 = vpack.c.b16 %v473, %v471
  %v490 = vpack.c.b16 %v474, %v472
  %507 = vmatpush.bf16.msra.mxu0 %v306
  %508 = vmatpush.bf16.msra.mxu0 %v305
  %509 = vmatpush.bf16.msra.mxu0 %v304
  %510 = vmatpush.bf16.msra.mxu0 %v303
  %511 = vmatpush.bf16.msra.mxu0 %v302
  %512 = vmatpush.bf16.msra.mxu0 %v301
  %513 = vmatpush.bf16.msra.mxu0 %v300
  %514 = vmatpush.bf16.msra.mxu0 %v299
  %515 = vmatmul.bf16.gmra.mxu0 %v475
  %v516 = vpop.f32.mrf.mxu0
  %v517 = vadd.f32 %v350, %v516
  %v518 = vpop.f32.mrf.mxu0
  %v519 = vadd.f32 %v355, %v518
  %520 = vmatmul.bf16.gmra.mxu0 %v477
  %v521 = vpop.f32.mrf.mxu0
  %v522 = vadd.f32 %v360, %v521
  %v523 = vpop.f32.mrf.mxu0
  %v524 = vadd.f32 %v365, %v523
  %525 = vmatmul.bf16.gmra.mxu0 %v479
  %v526 = vpop.f32.mrf.mxu0
  %v527 = vadd.f32 %v370, %v526
  %v528 = vpop.f32.mrf.mxu0
  %v529 = vadd.f32 %v375, %v528
  %530 = vmatmul.bf16.gmra.mxu0 %v481
  %v531 = vpop.f32.mrf.mxu0
  %v532 = vadd.f32 %v380, %v531
  %v533 = vpop.f32.mrf.mxu0
  %v534 = vadd.f32 %v385, %v533
  %535 = vmatmul.bf16.gmra.mxu0 %v483
  %v536 = vpop.f32.mrf.mxu0
  %v537 = vadd.f32 %v390, %v536
  %v538 = vpop.f32.mrf.mxu0
  %v539 = vadd.f32 %v395, %v538
  %540 = vmatmul.bf16.gmra.mxu0 %v485
  %v541 = vpop.f32.mrf.mxu0
  %v542 = vadd.f32 %v400, %v541
  %v543 = vpop.f32.mrf.mxu0
  %v544 = vadd.f32 %v405, %v543
  %545 = vmatmul.bf16.gmra.mxu0 %v487
  %v546 = vpop.f32.mrf.mxu0
  %v547 = vadd.f32 %v410, %v546
  %v548 = vpop.f32.mrf.mxu0
  %v549 = vadd.f32 %v415, %v548
  %550 = vmatmul.bf16.gmra.mxu0 %v489
  %v551 = vpop.f32.mrf.mxu0
  %v552 = vadd.f32 %v420, %v551
  %v553 = vpop.f32.mrf.mxu0
  %v554 = vadd.f32 %v425, %v553
  %555 = vdwg.mxu0
  %556 = vmatpush.bf16.msra.mxu0 %v314
  %557 = vmatpush.bf16.msra.mxu0 %v313
  %558 = vmatpush.bf16.msra.mxu0 %v312
  %559 = vmatpush.bf16.msra.mxu0 %v311
  %560 = vmatpush.bf16.msra.mxu0 %v310
  %561 = vmatpush.bf16.msra.mxu0 %v309
  %562 = vmatpush.bf16.msra.mxu0 %v308
  %563 = vmatpush.bf16.msra.mxu0 %v307
  %564 = vmatmul.bf16.gmra.mxu0 %v476
  %v565 = vpop.f32.mrf.mxu0
  %v566 = vadd.f32 %v517, %v565
  %v567 = vpop.f32.mrf.mxu0
  %v568 = vadd.f32 %v519, %v567
  %569 = vmatmul.bf16.gmra.mxu0 %v478
  %v570 = vpop.f32.mrf.mxu0
  %v571 = vadd.f32 %v522, %v570
  %v572 = vpop.f32.mrf.mxu0
  %v573 = vadd.f32 %v524, %v572
  %574 = vmatmul.bf16.gmra.mxu0 %v480
  %v575 = vpop.f32.mrf.mxu0
  %v576 = vadd.f32 %v527, %v575
  %v577 = vpop.f32.mrf.mxu0
  %v578 = vadd.f32 %v529, %v577
  %579 = vmatmul.bf16.gmra.mxu0 %v482
  %v580 = vpop.f32.mrf.mxu0
  %v581 = vadd.f32 %v532, %v580
  %v582 = vpop.f32.mrf.mxu0
  %v583 = vadd.f32 %v534, %v582
  %584 = vmatmul.bf16.gmra.mxu0 %v484
  %v585 = vpop.f32.mrf.mxu0
  %v586 = vadd.f32 %v537, %v585
  %v587 = vpop.f32.mrf.mxu0
  %v588 = vadd.f32 %v539, %v587
  %589 = vmatmul.bf16.gmra.mxu0 %v486
  %v590 = vpop.f32.mrf.mxu0
  %v591 = vadd.f32 %v542, %v590
  %v592 = vpop.f32.mrf.mxu0
  %v593 = vadd.f32 %v544, %v592
  %594 = vmatmul.bf16.gmra.mxu0 %v488
  %v595 = vpop.f32.mrf.mxu0
  %v596 = vadd.f32 %v547, %v595
  %v597 = vpop.f32.mrf.mxu0
  %v598 = vadd.f32 %v549, %v597
  %599 = vmatmul.bf16.gmra.mxu0 %v490
  %v600 = vpop.f32.mrf.mxu0
  %v601 = vadd.f32 %v552, %v600
  %v602 = vpop.f32.mrf.mxu0
  %v603 = vadd.f32 %v554, %v602
  %604 = vdwg.mxu0
  %v605 = vmax.f32 %v566, 0.0
  %v606 = vmax.f32 %v568, 0.0
  %v607 = vmax.f32 %v571, 0.0
  %v608 = vmax.f32 %v573, 0.0
  %v609 = vmax.f32 %v576, 0.0
  %v610 = vmax.f32 %v578, 0.0
  %v611 = vmax.f32 %v581, 0.0
  %v612 = vmax.f32 %v583, 0.0
  %v613 = vmax.f32 %v586, 0.0
  %v614 = vmax.f32 %v588, 0.0
  %v615 = vmax.f32 %v591, 0.0
  %v616 = vmax.f32 %v593, 0.0
  %v617 = vmax.f32 %v596, 0.0
  %v618 = vmax.f32 %v598, 0.0
  %v619 = vmax.f32 %v601, 0.0
  %v620 = vmax.f32 %v603, 0.0
  %v621 = vpack.c.bf16 %v606, %v605
  %v622 = vpack.c.bf16 %v608, %v607
  %v623 = vpack.c.bf16 %v610, %v609
  %v624 = vpack.c.bf16 %v612, %v611
  %v625 = vpack.c.bf16 %v614, %v613
  %v626 = vpack.c.bf16 %v616, %v615
  %v627 = vpack.c.bf16 %v618, %v617
  %v628 = vpack.c.bf16 %v620, %v619
  %v629 = vld [vmem:[%s4] sm:$0xf]
  %630 = vmatpush.bf16.msra.mxu0 %v628
  %631 = vmatpush.bf16.msra.mxu0 %v627
  %632 = vmatpush.bf16.msra.mxu0 %v626
  %633 = vmatpush.bf16.msra.mxu0 %v625
  %634 = vmatpush.bf16.msra.mxu0 %v624
  %635 = vmatpush.bf16.msra.mxu0 %v623
  %636 = vmatpush.bf16.msra.mxu0 %v622
  %637 = vmatpush.bf16.msra.mxu0 %v621
  %638 = vmatmul.bf16.gmra.mxu0 %v629
  %v639 = vpop.f32.mrf.mxu0
  %v640 = vadd.f32 0.0, %v639
  %v641 = vpop.f32.mrf.mxu0
  %642 = vdwg.mxu0
  %s643 = sld [smem:[#allocation2]]
  %v644 = vstv %s643
  %v645 = vadd.f32 %v640, %v644
  %v646 = vtanh.pop %v645
  %647 = vst [vmem:[%s6] sm:$0x1] %v646
  // Predicated region
  $region26: #{actor_forward.1} parent=0 // pred_check
    _
  $region27: #{actor_forward.1} parent=0 // pred_check_branch
    %649 = sbr.rel (0) target = $region29
  $region28: #{actor_forward.1} parent=0 // pred_region
    _
  $region29: #{actor_forward.1} parent=0 // pred_fallthru
    _
  // Predicated region
  $region30: #{actor_forward.1} parent=0 // pred_check
    _
  $region31: #{actor_forward.1} parent=0 // pred_check_branch
    %651 = sbr.rel (0) target = $region33
  $region32: #{actor_forward.1} parent=0 // pred_region
    _
  $region33: #{actor_forward.1} parent=0 // pred_fallthru
    _

</llo_original>
